<compile_context>
chip_gen: v7x
topology: tpu7x:2x2x1
jax: 0.10.0
libtpu: 0.0.40
codegen_flags: <defaults>
</compile_context>

<pallas_src>
import numpy as np

import jax
import jax.numpy as jnp
from jax.experimental import pallas as pl
from jax.experimental.pallas import tpu as pltpu


def get_padding_for_same(kernel_size):
    pad1 = kernel_size // 2
    pad0 = pad1 - 1 if kernel_size % 2 == 0 else pad1
    return (pad0, pad1)


def _resolve_params(kernel_size, sigma):
    """Reproduce GaussianBlur.__init__ parameter resolution."""
    if kernel_size is None and sigma is None:
        raise ValueError("At least one of kernel_size and sigma must be provided")
    elif kernel_size is not None and sigma is not None:
        pass
    elif kernel_size is None and sigma is not None:
        kernel_size = 2 * int(round(sigma * 3)) + 1
    elif kernel_size is not None and sigma is None:
        sigma = kernel_size / 6
    pad0, pad1 = get_padding_for_same(kernel_size)
    pad = max(pad0, pad1)
    return int(kernel_size), float(sigma), int(pad)


def _gaussian_1d(K, sigma):
    """Normalized 1-D taps; outer(w, w) == normalized 2-D Gaussian kernel."""
    g = np.arange(K, dtype=np.float32)
    mean = (K - 1) / 2.0
    w = np.exp(-((g - mean) ** 2) / (2.0 * sigma ** 2)).astype(np.float32)
    return (w / w.sum()).astype(np.float32)


def _banded_matrices(H, W, K, pad, w1d):
    """Banded matrices implementing the two 1-D passes WITH zero padding folded in.

    out = A_h @ x @ B_w  where
      A_h[i, r] = w1d[r - i + pad]   (row / H pass, cross-correlation)
      B_w[c, j] = w1d[c - j + pad]   (col / W pass)
    Out-of-range taps (the zero-padded halo) are simply absent from the band.
    """
    Ho = H + 2 * pad - K + 1
    Wo = W + 2 * pad - K + 1
    A = np.zeros((Ho, H), dtype=np.float32)
    for i in range(Ho):
        for k in range(K):
            r = i + k - pad
            if 0 <= r < H:
                A[i, r] = w1d[k]
    B = np.zeros((W, Wo), dtype=np.float32)
    for j in range(Wo):
        for k in range(K):
            c = j + k - pad
            if 0 <= c < W:
                B[c, j] = w1d[k]
    return A, B, Ho, Wo


def _vmem_limit_bytes():
    """Generation-aware VMEM limit (v7x: 64 MiB/TC, v5e/v6e: 128 MiB)."""
    try:
        cap = int(pltpu.get_tpu_info().vmem_capacity_bytes)
    except Exception:
        cap = 64 * 1024 * 1024              # conservative: assume v7x
    return min((cap * 3) // 4, 96 * 1024 * 1024)


def _pick_pack_factor(B, H, W, Ho, Wo, itemsize, budget_bytes, min_grid=8):
    """Number of slabs packed along the lane axis per grid step.

    Priorities: (1) all (double-buffered) blocks + bands fit the VMEM budget,
    (2) make the last dim lane-dense (P*W >= 128), (3) beyond density only grow
    P if the grid keeps >= min_grid steps (v7x: >= 4 pipelined steps per core).
    """
    def pad_to(n, m):
        return ((n + m - 1) // m) * m

    def vmem_bytes(p):
        a = pad_to(Ho, 8) * pad_to(H, 128)
        bb = pad_to(p * W, 8) * pad_to(p * Wo, 128)
        xin = pad_to(H, 8) * pad_to(p * W, 128)
        out = pad_to(Ho, 8) * pad_to(p * Wo, 128)
        return 2 * (a + bb + xin + out) * itemsize   # default double buffering

    best = 1
    for p in range(1, B + 1):
        if B % p:
            continue
        if vmem_bytes(p) > budget_bytes:
            break
        if p == best:
            continue
        if best * W < 128:
            best = p                                  # not lane-dense yet: grow
        elif (B // p) >= min_grid and p * W <= 512:
            best = p                                  # dense: grow only if grid stays long
        else:
            break
    return best


def _blur_kernel(a_ref, b_ref, x_ref, o_ref):
    """a_ref: (Ho, H) row band (resident); b_ref: (P*W, P*Wo) block-diag col band
    (resident); x_ref: (1, H, P*W) lane-packed slabs; o_ref: (1, Ho, P*Wo)."""
    a = a_ref[...]
    b = b_ref[...]
    x = x_ref[0]
    # H-pass: single matmul, N = P*W lanes (lane-dense).
    p1 = jnp.dot(a, x, preferred_element_type=jnp.float32)
    # W-pass: block-diagonal band keeps the packed slabs independent.
    p1 = p1.astype(b.dtype)     # no-op for f32; keeps the bf16 path MXU-native
    out = jnp.dot(p1, b, preferred_element_type=jnp.float32)
    o_ref[0] = out.astype(o_ref.dtype)   # one whole-block, lane-dense store


def gaussian_blur(x, kernel_size=None, sigma=None):
    """x: [N, C, H, W]. Matches GaussianBlur.forward (depthwise conv, zero pad)."""
    K, sigma, pad = _resolve_params(kernel_size, sigma)
    N, C, H, W = x.shape
    out_dtype = x.dtype
    compute_dtype = jnp.bfloat16 if x.dtype == jnp.bfloat16 else jnp.float32

    w1d = _gaussian_1d(K, sigma)
    A_np, B_np, Ho, Wo = _banded_matrices(H, W, K, pad, w1d)

    B = N * C                           # same Gaussian for every channel
    itemsize = jnp.dtype(compute_dtype).itemsize
    vmem_limit = _vmem_limit_bytes()
    block_budget = (vmem_limit * 3) // 4
    P = _pick_pack_factor(B, H, W, Ho, Wo, itemsize, block_budget)
    G = B // P

    # Lane-pack P slabs along the last (lane) axis.  When P == 1 (W already
    # lane-dense) the transposes below are over a size-1 axis, i.e. free.
    x_packed = (x.astype(compute_dtype)
                 .reshape(G, P, H, W)
                 .transpose(0, 2, 1, 3)
                 .reshape(G, H, P * W))

    A_h = jnp.asarray(A_np, dtype=compute_dtype)                       # (Ho, H)
    B_blk = jnp.asarray(np.kron(np.eye(P, dtype=np.float32), B_np),
                        dtype=compute_dtype)                           # (P*W, P*Wo)

    # TODO(synk): strip-tile Ho/Wo (extra grid axes + (K-1)-halo band slices)
    # for images so large that the O(H^2) dense bands or a full slab no longer
    # fit the per-generation VMEM budget.

    out_packed = pl.pallas_call(
        _blur_kernel,
        out_shape=jax.ShapeDtypeStruct((G, Ho, P * Wo), out_dtype),
        grid_spec=pltpu.PrefetchScalarGridSpec(
            num_scalar_prefetch=0,
            grid=(G,),
            in_specs=[
                pl.BlockSpec((Ho, H), lambda i: (0, 0)),           # band, resident
                pl.BlockSpec((P * W, P * Wo), lambda i: (0, 0)),   # band, resident
                pl.BlockSpec((1, H, P * W), lambda i: (i, 0, 0)),
            ],
            out_specs=pl.BlockSpec((1, Ho, P * Wo), lambda i: (i, 0, 0)),
        ),
        compiler_params=pltpu.CompilerParams(
            dimension_semantics=("parallel",),
            vmem_limit_bytes=vmem_limit,
        ),
    )(A_h, B_blk, x_packed)

    out = (out_packed.reshape(G, Ho, P, Wo)
                     .transpose(0, 2, 1, 3)
                     .reshape(N, C, Ho, Wo))
    return out


def _reference_blur(x, kernel_size=None, sigma=None):
    """Pure-JAX reference (depthwise lax.conv) matching the PyTorch module."""
    K, sigma, pad = _resolve_params(kernel_size, sigma)
    g = jnp.arange(K, dtype=jnp.float32)
    mean = (K - 1) / 2.0
    k1 = jnp.exp(-((g - mean) ** 2) / (2.0 * sigma ** 2))
    k2d = k1[:, None] * k1[None, :]
    k2d = k2d / jnp.sum(k2d)
    N, C, H, W = x.shape
    w = jnp.broadcast_to(k2d[None, None], (C, 1, K, K))  # OIHW depthwise
    return jax.lax.conv_general_dilated(
        x, w,
        window_strides=(1, 1),
        padding=((pad, pad), (pad, pad)),
        feature_group_count=C,
        dimension_numbers=("NCHW", "OIHW", "NCHW"),
    )


def _check(x, kernel_size):
    out = jax.block_until_ready(gaussian_blur(x, kernel_size=kernel_size))
    ref = _reference_blur(x, kernel_size=kernel_size)
    assert out.shape == ref.shape, (out.shape, ref.shape)
    err = float(jnp.max(jnp.abs(out - ref)))
    assert jnp.allclose(out, ref, atol=1e-5, rtol=1e-5), err
    return out


if __name__ == "__main__":
    key = jax.random.PRNGKey(0)

    # Primary case from the module usage: small NCHW batch, odd kernel,
    # sigma defaults to kernel_size / 6 as in the PyTorch module.
    N, C, H, W = 2, 4, 16, 16
    x = jax.random.normal(key, (N, C, H, W), dtype=jnp.float32)
    _check(x, kernel_size=5)

    # Even kernel size -> asymmetric padding -> (H+1, W+1) output, as in the
    # PyTorch module (pad = max(pad0, pad1) on both sides).
    _check(x, kernel_size=4)

    # Larger batch -> exercises grid > 1 with lane-packed groups (P < N*C).
    x2 = jax.random.normal(jax.random.PRNGKey(0), (4, 4, 16, 16), dtype=jnp.float32)
    _check(x2, kernel_size=5)

    print("KERNEL_OK")
</pallas_src>

<mosaic_0001>
module attributes {stable_mosaic.version = 11 : i64} {
  func.func @_blur_kernel(%arg0: i32, %arg1: memref<16x16xf32, #tpu.memory_space<vmem>>, %arg2: memref<128x128xf32, #tpu.memory_space<vmem>>, %arg3: memref<1x16x128xf32, #tpu.memory_space<vmem>>, %arg4: memref<1x16x128xf32, #tpu.memory_space<vmem>>) attributes {dimension_semantics = [#tpu.dimension_semantics<parallel>], iteration_bounds = array<i64: 1>, scalar_prefetch = 0 : i64, scratch_operands = 0 : i64, tpu.core_type = #tpu.core_type<tc>, window_params = [{pipeline_mode = #tpu.pipeline_mode<synchronous>, transform_indices = @transform_0, window_bounds = array<i64: 16, 16>}, {pipeline_mode = #tpu.pipeline_mode<synchronous>, transform_indices = @transform_1, window_bounds = array<i64: 128, 128>}, {transform_indices = @transform_2, window_bounds = array<i64: 1, 16, 128>}, {transform_indices = @transform_3, window_bounds = array<i64: 1, 16, 128>}]} {
    %c0 = arith.constant 0 : index
    %c0_0 = arith.constant 0 : index
    %0 = vector.load %arg1[%c0, %c0_0] : memref<16x16xf32, #tpu.memory_space<vmem>>, vector<16x16xf32>
    %c0_1 = arith.constant 0 : index
    %c0_2 = arith.constant 0 : index
    %1 = vector.load %arg2[%c0_1, %c0_2] : memref<128x128xf32, #tpu.memory_space<vmem>>, vector<128x128xf32>
    %c0_3 = arith.constant 0 : index
    %c0_4 = arith.constant 0 : index
    %c0_5 = arith.constant 0 : index
    %2 = vector.load %arg3[%c0_3, %c0_4, %c0_5] : memref<1x16x128xf32, #tpu.memory_space<vmem>>, vector<1x16x128xf32>
    %3 = vector.shape_cast %2 : vector<1x16x128xf32> to vector<16x128xf32>
    %cst = arith.constant dense<0.000000e+00> : vector<16x128xf32>
    %4 = tpu.matmul %0, %3, %cst {dimension_numbers = #tpu.dot_dimension_numbers<[1], [0], [0], [1], [0, 0, 1, 1], [], []>} : vector<16x16xf32>, vector<16x128xf32>, vector<16x128xf32> -> vector<16x128xf32>
    %cst_6 = arith.constant dense<0.000000e+00> : vector<16x128xf32>
    %5 = tpu.matmul %4, %1, %cst_6 {dimension_numbers = #tpu.dot_dimension_numbers<[1], [0], [0], [1], [0, 0, 1, 1], [], []>} : vector<16x128xf32>, vector<128x128xf32>, vector<16x128xf32> -> vector<16x128xf32>
    %c0_7 = arith.constant 0 : index
    %c0_8 = arith.constant 0 : index
    %c0_9 = arith.constant 0 : index
    %6 = vector.load %arg4[%c0_7, %c0_8, %c0_9] : memref<1x16x128xf32, #tpu.memory_space<vmem>>, vector<1x16x128xf32>
    %7 = vector.shape_cast %6 : vector<1x16x128xf32> to vector<16x128xf32>
    %8 = vector.shape_cast %5 : vector<16x128xf32> to vector<1x16x128xf32>
    tpu.vector_store %arg4[%c0_7, %c0_8, %c0_9], %8 {strides = array<i32>} : memref<1x16x128xf32, #tpu.memory_space<vmem>>, vector<1x16x128xf32>,
    return
  }
  func.func @transform_0(%arg0: i32) -> (i32, i32) {
    %c0_i32 = arith.constant 0 : i32
    %c0_i32_0 = arith.constant 0 : i32
    %c0_i32_1 = arith.constant 0 : i32
    return %c0_i32, %c0_i32_0 : i32, i32
  }
  func.func @transform_1(%arg0: i32) -> (i32, i32) {
    %c0_i32 = arith.constant 0 : i32
    %c0_i32_0 = arith.constant 0 : i32
    %c0_i32_1 = arith.constant 0 : i32
    return %c0_i32, %c0_i32_0 : i32, i32
  }
  func.func @transform_2(%arg0: i32) -> (i32, i32, i32) {
    %c0_i32 = arith.constant 0 : i32
    %c0_i32_0 = arith.constant 0 : i32
    %c0_i32_1 = arith.constant 0 : i32
    return %arg0, %c0_i32, %c0_i32_0 : i32, i32, i32
  }
  func.func @transform_3(%arg0: i32) -> (i32, i32, i32) {
    %c0_i32 = arith.constant 0 : i32
    %c0_i32_0 = arith.constant 0 : i32
    %c0_i32_1 = arith.constant 0 : i32
    return %arg0, %c0_i32, %c0_i32_0 : i32, i32, i32
  }
}

</mosaic_0001>

<llo_original>
// kernel: tpu_custom_call.1
$region0: #{tpu_custom_call.1}
  #allocation0 [shape = 'u32[]', space=smem, size = 0x4, offset = 0x4, fixed_abs, tag = 'smem constant byte address 0x4 - core index']
  #allocation1 [shape = 'u32[144,128]{1,0:T(1,128)}', space=vmem, size = 0x12000, scoped, tag = 'internal scratch']
  %s0 = inlined_call_operand.hbm [shape: f32[16,16], index: 0, kind: input, shape index: {}]
  %s1 = inlined_call_operand.hbm [shape: f32[128,128], index: 1, kind: input, shape index: {}]
  %s2 = inlined_call_operand.hbm [shape: f32[1,16,128], index: 2, kind: input, shape index: {}]
  %s3 = inlined_call_operand.hbm [shape: f32[1,16,128], index: 3, kind: output, shape index: {}]
  %s4 = sld [smem:[#allocation0]]
  $region34: #{tpu_custom_call.1} parent=0
    _
  %s6 = ssub.s32 1, %s4
  %s7 = scalar_select 0, %s6, %s4
  $region1: #{tpu_custom_call.1} parent=0
    #allocation2 [shape = 'u8[8192]{0}', space=vmem, size = 0x2000, scoped, tag = 'input window, operand 0, single buffered']
    #allocation3 [shape = 's32[1]{0}', space=sflag, size = 0x4, scoped, tag = 'scoped memory for tpu_custom_call.1']
    #allocation4 [shape = 's32[1]{0}', space=sflag, size = 0x4, scoped, tag = 'scoped memory for tpu_custom_call.1']
    #allocation5 [shape = 'u8[65536]{0}', space=vmem, size = 0x10000, scoped, tag = 'input window, operand 1, single buffered']
    #allocation6 [shape = 's32[1]{0}', space=sflag, size = 0x4, scoped, tag = 'scoped memory for tpu_custom_call.1']
    #allocation7 [shape = 'u8[8192]{0}', space=vmem, size = 0x2000, scoped, tag = 'input window, operand 2, single buffered']
    #allocation8 [shape = 'u8[8192]{0}', space=vmem, size = 0x2000, scoped, tag = 'output window, operand 0, single buffered']
    %8 = vsyncpa [#allocation3], 0
    %9 = vsyncpa [#allocation6], 0
    %10 = vsyncpa [#allocation4], 0
    // Predicated region
    $region2: #{tpu_custom_call.1} parent=1 // pred_check
      _
    $region3: #{tpu_custom_call.1} parent=1 // pred_check_branch
      %12 = sbr.rel (0) target = $region5
    $region4: #{tpu_custom_call.1} parent=1 // pred_region
      %s14 = ssub.s32 256, 256
      %15 = vsyncadd [#allocation3], %s14
      %s16 = sshll.u32 [#allocation2], 4
      %s17 = int_to_ptr.vmem [resolvable:$true] %s16
      %22 = dma.hbm_to_vmem [thread:$0]  %s0, 256, %s17, [#allocation3], 128, 128, 8
    $region5: #{tpu_custom_call.1} parent=1 // pred_fallthru
      _
    // Predicated region
    $region6: #{tpu_custom_call.1} parent=1 // pred_check
      _
    $region7: #{tpu_custom_call.1} parent=1 // pred_check_branch
      %24 = sbr.rel (0) target = $region9
    $region8: #{tpu_custom_call.1} parent=1 // pred_region
      %s26 = ssub.s32 2048, 2048
      %27 = vsyncadd [#allocation6], %s26
      %s28 = sshll.u32 [#allocation5], 4
      %s29 = int_to_ptr.vmem [resolvable:$true] %s28
      %34 = dma.hbm_to_vmem [thread:$0]  %s1, 2048, %s29, [#allocation6], 128, 128, 8
    $region9: #{tpu_custom_call.1} parent=1 // pred_fallthru
      _
    // Predicated region
    $region10: #{tpu_custom_call.1} parent=1 // pred_check
      _
    $region11: #{tpu_custom_call.1} parent=1 // pred_check_branch
      %36 = sbr.rel (0) target = $region13
    $region12: #{tpu_custom_call.1} parent=1 // pred_region
      %s38 = ssub.s32 256, 256
      %39 = vsyncadd [#allocation6], %s38
      %s40 = sshll.u32 [#allocation7], 4
      %s41 = int_to_ptr.vmem [resolvable:$true] %s40
      %46 = dma.hbm_to_vmem [thread:$0]  %s2, 256, %s41, [#allocation6], 128, 128, 8
    $region13: #{tpu_custom_call.1} parent=1 // pred_fallthru
      _
    // Predicated region
    $region14: #{tpu_custom_call.1} parent=1 // pred_check
      _
    $region15: #{tpu_custom_call.1} parent=1 // pred_check_branch
      %48 = sbr.rel (0) target = $region17
    $region16: #{tpu_custom_call.1} parent=1 // pred_region
      %49 = dma.done [#allocation3], 256
    $region17: #{tpu_custom_call.1} parent=1 // pred_fallthru
      _
    // Predicated region
    $region18: #{tpu_custom_call.1} parent=1 // pred_check
      _
    $region19: #{tpu_custom_call.1} parent=1 // pred_check_branch
      %51 = sbr.rel (0) target = $region21
    $region20: #{tpu_custom_call.1} parent=1 // pred_region
      %52 = dma.done [#allocation6], 2048
    $region21: #{tpu_custom_call.1} parent=1 // pred_fallthru
      _
    // Predicated region
    $region22: #{tpu_custom_call.1} parent=1 // pred_check
      _
    $region23: #{tpu_custom_call.1} parent=1 // pred_check_branch
      %54 = sbr.rel (0) target = $region25
    $region24: #{tpu_custom_call.1} parent=1 // pred_region
      %55 = dma.done [#allocation6], 256
    $region25: #{tpu_custom_call.1} parent=1 // pred_fallthru
      _
    %v56 = vld [vmem:[#allocation2] sm:$0xff]
    %v57 = vld [vmem:[#allocation2 + $0x8] sm:$0xff]
    %v58 = vld [vmem:[#allocation5] sm:$0xff]
    %v59 = vld [vmem:[#allocation5 + $0x8] sm:$0xff]
    %v60 = vld [vmem:[#allocation5 + $0x10] sm:$0xff]
    %v61 = vld [vmem:[#allocation5 + $0x18] sm:$0xff]
    %v62 = vld [vmem:[#allocation5 + $0x20] sm:$0xff]
    %v63 = vld [vmem:[#allocation5 + $0x28] sm:$0xff]
    %v64 = vld [vmem:[#allocation5 + $0x30] sm:$0xff]
    %v65 = vld [vmem:[#allocation5 + $0x38] sm:$0xff]
    %v66 = vld [vmem:[#allocation5 + $0x40] sm:$0xff]
    %v67 = vld [vmem:[#allocation5 + $0x48] sm:$0xff]
    %v68 = vld [vmem:[#allocation5 + $0x50] sm:$0xff]
    %v69 = vld [vmem:[#allocation5 + $0x58] sm:$0xff]
    %v70 = vld [vmem:[#allocation5 + $0x60] sm:$0xff]
    %v71 = vld [vmem:[#allocation5 + $0x68] sm:$0xff]
    %v72 = vld [vmem:[#allocation5 + $0x70] sm:$0xff]
    %v73 = vld [vmem:[#allocation5 + $0x78] sm:$0xff]
    %v74 = vld [vmem:[#allocation7] sm:$0xff]
    %v75 = vld [vmem:[#allocation7 + $0x8] sm:$0xff]
    %vm76 = vcmask 130048
    %v78 = vsel %vm76, %v56, 0
    %v81 = vsel %vm76, %v57, 0
    %83 = vmatprep.subr.mxu0 0.0
    %84 = vmatpush1.msra.mxu0 %v74
    %85 = vmatprep.subr.mxu0 0.0
    %86 = vmatpush1.msra.mxu0 %v75
    %87 = vmatprep.subr.mxu0 0.0
    %88 = vmatpush1.msra.mxu0 0.0
    %89 = vmatprep.subr.mxu0 0.0
    %90 = vmatpush1.msra.mxu0 0.0
    %91 = vmatprep.subr.mxu0 0.0
    %92 = vmatpush1.msra.mxu0 0.0
    %93 = vmatprep.subr.mxu0 0.0
    %94 = vmatpush1.msra.mxu0 0.0
    %95 = vmatprep.subr.mxu0 0.0
    %96 = vmatpush1.msra.mxu0 0.0
    %97 = vmatprep.subr.mxu0 0.0
    %98 = vmatpush1.msra.mxu0 0.0
    %99 = vmatprep.subr.mxu0 0.0
    %100 = vmatpush1.msra.mxu0 0.0
    %101 = vmatprep.subr.mxu0 0.0
    %102 = vmatpush1.msra.mxu0 0.0
    %103 = vmatprep.subr.mxu0 0.0
    %104 = vmatpush1.msra.mxu0 0.0
    %105 = vmatprep.subr.mxu0 0.0
    %106 = vmatpush1.msra.mxu0 0.0
    %107 = vmatprep.subr.mxu0 0.0
    %108 = vmatpush1.msra.mxu0 0.0
    %109 = vmatprep.subr.mxu0 0.0
    %110 = vmatpush1.msra.mxu0 0.0
    %111 = vmatprep.subr.mxu0 0.0
    %112 = vmatpush1.msra.mxu0 0.0
    %113 = vmatprep.subr.mxu0 0.0
    %114 = vmatpush1.msra.mxu0 0.0
    %115 = vmatprep.subr.mxu0 0.0
    %116 = vmatpush1.msra.mxu0 0.0
    %117 = vmatprep.subr.mxu0 0.0
    %118 = vmatpush1.msra.mxu0 0.0
    %119 = vmatprep.subr.mxu0 0.0
    %120 = vmatpush1.msra.mxu0 0.0
    %121 = vmatprep.subr.mxu0 0.0
    %122 = vmatpush1.msra.mxu0 0.0
    %123 = vmatprep.subr.mxu0 0.0
    %124 = vmatpush1.msra.mxu0 0.0
    %125 = vmatprep.subr.mxu0 0.0
    %126 = vmatpush1.msra.mxu0 0.0
    %127 = vmatprep.subr.mxu0 0.0
    %128 = vmatpush1.msra.mxu0 0.0
    %129 = vmatprep.subr.mxu0 0.0
    %130 = vmatpush1.msra.mxu0 0.0
    %131 = vmatprep.subr.mxu0 0.0
    %132 = vmatpush1.msra.mxu0 0.0
    %133 = vmatprep.subr.mxu0 0.0
    %134 = vmatpush1.msra.mxu0 0.0
    %135 = vmatprep.subr.mxu0 0.0
    %136 = vmatpush1.msra.mxu0 0.0
    %137 = vmatprep.subr.mxu0 0.0
    %138 = vmatpush1.msra.mxu0 0.0
    %139 = vmatprep.subr.mxu0 0.0
    %140 = vmatpush1.msra.mxu0 0.0
    %141 = vmatprep.subr.mxu0 0.0
    %142 = vmatpush1.msra.mxu0 0.0
    %143 = vmatprep.subr.mxu0 0.0
    %144 = vmatpush1.msra.mxu0 0.0
    %145 = vmatprep.subr.mxu0 0.0
    %146 = vmatpush1.msra.mxu0 0.0
    %147 = vmatprep.mubr.f32.mxu0 0.0
    %148 = vmatmul.mubr.f32.gmra.mrb[0].mxu0 %v78
    %v149 = vpop.f32.mrb[0].mxu0
    %v150 = vadd.f32 0.0, %v149
    %v151 = vpop.f32.mrb[0].mxu0
    %152 = vmatprep.mubr.f32.mxu0 0.0
    %153 = vmatmul.mubr.f32.gmra.mrb[0].mxu0 %v81
    %v154 = vpop.f32.mrb[0].mxu0
    %v155 = vadd.f32 0.0, %v154
    %v156 = vpop.f32.mrb[0].mxu0
    %157 = vdwg.mxu0
    %158 = vmatprep.subr.mxu0 0.0
    %159 = vmatpush1.msra.mxu0 %v58
    %160 = vmatprep.subr.mxu0 0.0
    %161 = vmatpush1.msra.mxu0 %v59
    %162 = vmatprep.subr.mxu0 0.0
    %163 = vmatpush1.msra.mxu0 %v60
    %164 = vmatprep.subr.mxu0 0.0
    %165 = vmatpush1.msra.mxu0 %v61
    %166 = vmatprep.subr.mxu0 0.0
    %167 = vmatpush1.msra.mxu0 %v62
    %168 = vmatprep.subr.mxu0 0.0
    %169 = vmatpush1.msra.mxu0 %v63
    %170 = vmatprep.subr.mxu0 0.0
    %171 = vmatpush1.msra.mxu0 %v64
    %172 = vmatprep.subr.mxu0 0.0
    %173 = vmatpush1.msra.mxu0 %v65
    %174 = vmatprep.subr.mxu0 0.0
    %175 = vmatpush1.msra.mxu0 %v66
    %176 = vmatprep.subr.mxu0 0.0
    %177 = vmatpush1.msra.mxu0 %v67
    %178 = vmatprep.subr.mxu0 0.0
    %179 = vmatpush1.msra.mxu0 %v68
    %180 = vmatprep.subr.mxu0 0.0
    %181 = vmatpush1.msra.mxu0 %v69
    %182 = vmatprep.subr.mxu0 0.0
    %183 = vmatpush1.msra.mxu0 %v70
    %184 = vmatprep.subr.mxu0 0.0
    %185 = vmatpush1.msra.mxu0 %v71
    %186 = vmatprep.subr.mxu0 0.0
    %187 = vmatpush1.msra.mxu0 %v72
    %188 = vmatprep.subr.mxu0 0.0
    %189 = vmatpush1.msra.mxu0 %v73
    %190 = vmatprep.subr.mxu0 0.0
    %191 = vmatpush1.msra.mxu0 0.0
    %192 = vmatprep.subr.mxu0 0.0
    %193 = vmatpush1.msra.mxu0 0.0
    %194 = vmatprep.subr.mxu0 0.0
    %195 = vmatpush1.msra.mxu0 0.0
    %196 = vmatprep.subr.mxu0 0.0
    %197 = vmatpush1.msra.mxu0 0.0
    %198 = vmatprep.subr.mxu0 0.0
    %199 = vmatpush1.msra.mxu0 0.0
    %200 = vmatprep.subr.mxu0 0.0
    %201 = vmatpush1.msra.mxu0 0.0
    %202 = vmatprep.subr.mxu0 0.0
    %203 = vmatpush1.msra.mxu0 0.0
    %204 = vmatprep.subr.mxu0 0.0
    %205 = vmatpush1.msra.mxu0 0.0
    %206 = vmatprep.subr.mxu0 0.0
    %207 = vmatpush1.msra.mxu0 0.0
    %208 = vmatprep.subr.mxu0 0.0
    %209 = vmatpush1.msra.mxu0 0.0
    %210 = vmatprep.subr.mxu0 0.0
    %211 = vmatpush1.msra.mxu0 0.0
    %212 = vmatprep.subr.mxu0 0.0
    %213 = vmatpush1.msra.mxu0 0.0
    %214 = vmatprep.subr.mxu0 0.0
    %215 = vmatpush1.msra.mxu0 0.0
    %216 = vmatprep.subr.mxu0 0.0
    %217 = vmatpush1.msra.mxu0 0.0
    %218 = vmatprep.subr.mxu0 0.0
    %219 = vmatpush1.msra.mxu0 0.0
    %220 = vmatprep.subr.mxu0 0.0
    %221 = vmatpush1.msra.mxu0 0.0
    %222 = vmatprep.mubr.f32.mxu0 0.0
    %223 = vmatmul.mubr.f32.gmra.mrb[0].mxu0 %v150
    %v224 = vpop.f32.mrb[0].mxu0
    %v225 = vadd.f32 0.0, %v224
    %v226 = vpop.f32.mrb[0].mxu0
    %227 = vmatprep.mubr.f32.mxu0 0.0
    %228 = vmatmul.mubr.f32.gmra.mrb[0].mxu0 %v155
    %v229 = vpop.f32.mrb[0].mxu0
    %v230 = vadd.f32 0.0, %v229
    %v231 = vpop.f32.mrb[0].mxu0
    %232 = vdwg.mxu0
    %233 = vst [vmem:[#allocation8] sm:$0xff] %v225
    %234 = vst [vmem:[#allocation8 + $0x8] sm:$0xff] %v230
    // Predicated region
    $region26: #{tpu_custom_call.1} parent=1 // pred_check
      _
    $region27: #{tpu_custom_call.1} parent=1 // pred_check_branch
      %236 = sbr.rel (0) target = $region29
    $region28: #{tpu_custom_call.1} parent=1 // pred_region
      %s238 = ssub.s32 256, 256
      %239 = vsyncadd [#allocation4], %s238
      %s240 = sshll.u32 [#allocation8], 4
      %s241 = int_to_ptr.vmem [resolvable:$true] %s240
      %246 = dma.vmem_to_hbm [thread:$0]  %s241, 256, %s3, [#allocation4], 128, 128, 8
    $region29: #{tpu_custom_call.1} parent=1 // pred_fallthru
      _
    // Predicated region
    $region30: #{tpu_custom_call.1} parent=1 // pred_check
      _
    $region31: #{tpu_custom_call.1} parent=1 // pred_check_branch
      %248 = sbr.rel (0) target = $region33
    $region32: #{tpu_custom_call.1} parent=1 // pred_region
      %249 = dma.done [#allocation4], 256
    $region33: #{tpu_custom_call.1} parent=1 // pred_fallthru
      _
    %250 = vsyncpa [#allocation3], 1
    %251 = vsyncpa [#allocation6], 1
    %252 = vsyncpa [#allocation4], 1

</llo_original>
